<compile_context>
chip_gen: v6e
topology: v6e:2x2x1
jax: 0.10.0
libtpu: 0.0.40
codegen_flags: <defaults>
</compile_context>

<pallas_src>
import functools

import jax
import jax.numpy as jnp
from jax.experimental import pallas as pl
from jax.experimental.pallas import tpu as pltpu

MIN_LOG_SIGMA = -20.0
MAX_LOG_SIGMA = 2.0
HIDDEN = 256
LANE = 128


def _round_up(n, m):
    return int(pl.cdiv(n, m) * m)


def sac_actor_kernel(
    x_ref,
    w1_ref, b1_ref,
    w2_ref, b2_ref,
    w3_ref, b3_ref,
    wh_ref, bh_ref,
    out_ref,
    *, action_dim,
):
    f32 = jnp.float32
    x = x_ref[...]  # (B_tile, K_pad) float32

    h = jnp.dot(x, w1_ref[...].astype(f32), preferred_element_type=f32) + b1_ref[...]
    h = jnp.maximum(h, 0.0)

    h = jnp.dot(h, w2_ref[...].astype(f32), preferred_element_type=f32) + b2_ref[...]
    h = jnp.maximum(h, 0.0)

    h = jnp.dot(h, w3_ref[...].astype(f32), preferred_element_type=f32) + b3_ref[...]
    h = jnp.maximum(h, 0.0)

    # Fused heads: columns [0, A) = mu, [A, 2A) = log_sigma, rest zero padding.
    y = jnp.dot(h, wh_ref[...].astype(f32), preferred_element_type=f32) + bh_ref[...]

    # Clamp only the log_sigma columns (static mask on the lane index).
    col = jax.lax.broadcasted_iota(jnp.int32, y.shape, dimension=1)
    is_sigma = (col >= action_dim) & (col < 2 * action_dim)
    y = jnp.where(is_sigma, jnp.clip(y, MIN_LOG_SIGMA, MAX_LOG_SIGMA), y)

    out_ref[...] = y


def sac_actor_forward(x, params, *, batch_tile=256):
    """Fused SacActor forward. x: (B, obs+goal) float32 -> (mu, log_sigma)."""
    (w1, b1), (w2, b2), (w3, b3), (wmu, bmu), (wsig, bsig) = params
    B, K = x.shape
    A = wmu.shape[1]

    k_pad = _round_up(K, LANE)
    head_pad = _round_up(max(2 * A, LANE), LANE)

    # --- parameter packing (would be done once, offline, in production) ---
    w1p = (jnp.zeros((k_pad, HIDDEN), jnp.float32).at[:K, :].set(w1)
           ).astype(jnp.bfloat16)
    w2p = w2.astype(jnp.bfloat16)
    w3p = w3.astype(jnp.bfloat16)
    wh = (jnp.zeros((HIDDEN, head_pad), jnp.float32)
          .at[:, :A].set(wmu)
          .at[:, A:2 * A].set(wsig)).astype(jnp.bfloat16)
    bh = (jnp.zeros((1, head_pad), jnp.float32)
          .at[:, :A].set(bmu)
          .at[:, A:2 * A].set(bsig))

    # --- batch tiling: tiny B -> one grid step; large B -> 256-row tiles ---
    b_tile = batch_tile if B >= batch_tile else _round_up(max(B, 1), 8)
    b_pad = _round_up(B, b_tile)
    grid = (b_pad // b_tile,)

    x_pad = jnp.zeros((b_pad, k_pad), jnp.float32).at[:B, :K].set(
        x.astype(jnp.float32))

    const = lambda i: (0, 0)
    in_specs = [
        pl.BlockSpec((b_tile, k_pad), lambda i: (i, 0)),   # x: tiled over batch
        pl.BlockSpec((k_pad, HIDDEN), const),              # weights/biases resident
        pl.BlockSpec((1, HIDDEN), const),
        pl.BlockSpec((HIDDEN, HIDDEN), const),
        pl.BlockSpec((1, HIDDEN), const),
        pl.BlockSpec((HIDDEN, HIDDEN), const),
        pl.BlockSpec((1, HIDDEN), const),
        pl.BlockSpec((HIDDEN, head_pad), const),
        pl.BlockSpec((1, head_pad), const),
    ]
    out_spec = pl.BlockSpec((b_tile, head_pad), lambda i: (i, 0))

    out = pl.pallas_call(
        functools.partial(sac_actor_kernel, action_dim=A),
        out_shape=jax.ShapeDtypeStruct((b_pad, head_pad), jnp.float32),
        grid=grid,
        in_specs=in_specs,
        out_specs=out_spec,
        compiler_params=pltpu.CompilerParams(
            dimension_semantics=("parallel",),
        ),
    )(x_pad, w1p, b1, w2p, b2, w3p, b3, wh, bh)

    mu = out[:B, :A]
    log_sigma = out[:B, A:2 * A]
    return mu, log_sigma


def init_linear(key, fan_in, fan_out):
    # nn.Linear-style init: U(-1/sqrt(fan_in), +1/sqrt(fan_in)).
    kw, kb = jax.random.split(key)
    bound = 1.0 / jnp.sqrt(jnp.float32(fan_in))
    w = jax.random.uniform(kw, (fan_in, fan_out), jnp.float32, -bound, bound)
    b = jax.random.uniform(kb, (1, fan_out), jnp.float32, -bound, bound)
    return w, b


def quantize_like_kernel(params):
    # The kernel stores weights as bf16 in HBM; mirror that rounding in the
    # reference so correctness is checked tightly (biases stay f32).
    def q(w):
        return w.astype(jnp.bfloat16).astype(jnp.float32)
    (w1, b1), (w2, b2), (w3, b3), (wmu, bmu), (wsig, bsig) = params
    return ((q(w1), b1), (q(w2), b2), (q(w3), b3), (q(wmu), bmu), (q(wsig), bsig))


def reference_forward(x, params):
    (w1, b1), (w2, b2), (w3, b3), (wmu, bmu), (wsig, bsig) = params
    h = jax.nn.relu(x @ w1 + b1)
    h = jax.nn.relu(h @ w2 + b2)
    h = jax.nn.relu(h @ w3 + b3)
    mu = h @ wmu + bmu
    log_sigma = jnp.clip(h @ wsig + bsig, MIN_LOG_SIGMA, MAX_LOG_SIGMA)
    return mu, log_sigma


if __name__ == "__main__":
    # Env params consistent with the module: obs=10, goal=5, action=4.
    env_params = {"obs": 10, "goal": 5, "action": 4, "action_max": 1.0}
    in_dim = env_params["obs"] + env_params["goal"]
    action = env_params["action"]

    key = jax.random.PRNGKey(0)
    kx, k1, k2, k3, k4, k5, kx2 = jax.random.split(key, 7)

    params = (
        init_linear(k1, in_dim, HIDDEN),
        init_linear(k2, HIDDEN, HIDDEN),
        init_linear(k3, HIDDEN, HIDDEN),
        init_linear(k4, HIDDEN, action),
        init_linear(k5, HIDDEN, action),
    )
    params_ref = quantize_like_kernel(params)

    # Shipped-shape path: B=2 -> single grid step, no tiling overhead.
    x_small = jax.random.normal(kx, (2, in_dim), jnp.float32)
    mu, log_sigma = sac_actor_forward(x_small, params)
    mu = jax.block_until_ready(mu)
    log_sigma = jax.block_until_ready(log_sigma)
    mu_r, ls_r = reference_forward(x_small, params_ref)
    assert mu.shape == (2, action) and log_sigma.shape == (2, action)
    assert jnp.allclose(mu, mu_r, atol=1e-3, rtol=1e-3)
    assert jnp.allclose(log_sigma, ls_r, atol=1e-3, rtol=1e-3)

    # Batched path: B=512 -> two 256-row "parallel" grid tiles, weights resident.
    x_big = jax.random.normal(kx2, (512, in_dim), jnp.float32)
    mu_b, ls_b = sac_actor_forward(x_big, params)
    jax.block_until_ready((mu_b, ls_b))
    mu_br, ls_br = reference_forward(x_big, params_ref)
    assert mu_b.shape == (512, action) and ls_b.shape == (512, action)
    assert jnp.allclose(mu_b, mu_br, atol=1e-3, rtol=1e-3)
    assert jnp.allclose(ls_b, ls_br, atol=1e-3, rtol=1e-3)

    # TODO(synk): act() (Normal.rsample + tanh-squashed log-prob) is a sampling
    # path outside forward(); not implemented as a kernel.
    print("KERNEL_OK")
</pallas_src>

<mosaic_0001>
module attributes {stable_mosaic.version = 11 : i64} {
  func.func @sac_actor_kernel(%arg0: i32, %arg1: memref<8x128xf32, #tpu.memory_space<vmem>>, %arg2: memref<128x256xbf16, #tpu.memory_space<vmem>>, %arg3: memref<1x256xf32, #tpu.memory_space<vmem>>, %arg4: memref<256x256xbf16, #tpu.memory_space<vmem>>, %arg5: memref<1x256xf32, #tpu.memory_space<vmem>>, %arg6: memref<256x256xbf16, #tpu.memory_space<vmem>>, %arg7: memref<1x256xf32, #tpu.memory_space<vmem>>, %arg8: memref<256x128xbf16, #tpu.memory_space<vmem>>, %arg9: memref<1x128xf32, #tpu.memory_space<vmem>>, %arg10: memref<8x128xf32, #tpu.memory_space<vmem>>) attributes {dimension_semantics = [#tpu.dimension_semantics<parallel>], iteration_bounds = array<i64: 1>, scalar_prefetch = 0 : i64, scratch_operands = 0 : i64, tpu.core_type = #tpu.core_type<tc>, window_params = [{transform_indices = @transform_0, window_bounds = array<i64: 8, 128>}, {pipeline_mode = #tpu.pipeline_mode<synchronous>, transform_indices = @transform_1, window_bounds = array<i64: 128, 256>}, {pipeline_mode = #tpu.pipeline_mode<synchronous>, transform_indices = @transform_2, window_bounds = array<i64: 1, 256>}, {pipeline_mode = #tpu.pipeline_mode<synchronous>, transform_indices = @transform_3, window_bounds = array<i64: 256, 256>}, {pipeline_mode = #tpu.pipeline_mode<synchronous>, transform_indices = @transform_4, window_bounds = array<i64: 1, 256>}, {pipeline_mode = #tpu.pipeline_mode<synchronous>, transform_indices = @transform_5, window_bounds = array<i64: 256, 256>}, {pipeline_mode = #tpu.pipeline_mode<synchronous>, transform_indices = @transform_6, window_bounds = array<i64: 1, 256>}, {pipeline_mode = #tpu.pipeline_mode<synchronous>, transform_indices = @transform_7, window_bounds = array<i64: 256, 128>}, {pipeline_mode = #tpu.pipeline_mode<synchronous>, transform_indices = @transform_8, window_bounds = array<i64: 1, 128>}, {transform_indices = @transform_9, window_bounds = array<i64: 8, 128>}]} {
    %c0 = arith.constant 0 : index
    %c0_0 = arith.constant 0 : index
    %0 = vector.load %arg1[%c0, %c0_0] : memref<8x128xf32, #tpu.memory_space<vmem>>, vector<8x128xf32>
    %c0_1 = arith.constant 0 : index
    %c0_2 = arith.constant 0 : index
    %1 = vector.load %arg2[%c0_1, %c0_2] : memref<128x256xbf16, #tpu.memory_space<vmem>>, vector<128x256xbf16>
    %2 = arith.extf %1 : vector<128x256xbf16> to vector<128x256xf32>
    %cst = arith.constant dense<0.000000e+00> : vector<8x256xf32>
    %3 = tpu.matmul %0, %2, %cst {dimension_numbers = #tpu.dot_dimension_numbers<[1], [0], [0], [1], [0, 0, 1, 1], [], []>} : vector<8x128xf32>, vector<128x256xf32>, vector<8x256xf32> -> vector<8x256xf32>
    %c0_3 = arith.constant 0 : index
    %c0_4 = arith.constant 0 : index
    %4 = vector.load %arg3[%c0_3, %c0_4] : memref<1x256xf32, #tpu.memory_space<vmem>>, vector<1x256xf32>
    %5 = vector.broadcast %4 : vector<1x256xf32> to vector<8x256xf32>
    %6 = arith.addf %3, %5 : vector<8x256xf32>
    %cst_5 = arith.constant 0.000000e+00 : f32
    %7 = vector.broadcast %cst_5 : f32 to vector<8x256xf32>
    %8 = arith.maximumf %6, %7 : vector<8x256xf32>
    %c0_6 = arith.constant 0 : index
    %c0_7 = arith.constant 0 : index
    %9 = vector.load %arg4[%c0_6, %c0_7] : memref<256x256xbf16, #tpu.memory_space<vmem>>, vector<256x256xbf16>
    %10 = arith.extf %9 : vector<256x256xbf16> to vector<256x256xf32>
    %cst_8 = arith.constant dense<0.000000e+00> : vector<8x256xf32>
    %11 = tpu.matmul %8, %10, %cst_8 {dimension_numbers = #tpu.dot_dimension_numbers<[1], [0], [0], [1], [0, 0, 1, 1], [], []>} : vector<8x256xf32>, vector<256x256xf32>, vector<8x256xf32> -> vector<8x256xf32>
    %c0_9 = arith.constant 0 : index
    %c0_10 = arith.constant 0 : index
    %12 = vector.load %arg5[%c0_9, %c0_10] : memref<1x256xf32, #tpu.memory_space<vmem>>, vector<1x256xf32>
    %13 = vector.broadcast %12 : vector<1x256xf32> to vector<8x256xf32>
    %14 = arith.addf %11, %13 : vector<8x256xf32>
    %cst_11 = arith.constant 0.000000e+00 : f32
    %15 = vector.broadcast %cst_11 : f32 to vector<8x256xf32>
    %16 = arith.maximumf %14, %15 : vector<8x256xf32>
    %c0_12 = arith.constant 0 : index
    %c0_13 = arith.constant 0 : index
    %17 = vector.load %arg6[%c0_12, %c0_13] : memref<256x256xbf16, #tpu.memory_space<vmem>>, vector<256x256xbf16>
    %18 = arith.extf %17 : vector<256x256xbf16> to vector<256x256xf32>
    %cst_14 = arith.constant dense<0.000000e+00> : vector<8x256xf32>
    %19 = tpu.matmul %16, %18, %cst_14 {dimension_numbers = #tpu.dot_dimension_numbers<[1], [0], [0], [1], [0, 0, 1, 1], [], []>} : vector<8x256xf32>, vector<256x256xf32>, vector<8x256xf32> -> vector<8x256xf32>
    %c0_15 = arith.constant 0 : index
    %c0_16 = arith.constant 0 : index
    %20 = vector.load %arg7[%c0_15, %c0_16] : memref<1x256xf32, #tpu.memory_space<vmem>>, vector<1x256xf32>
    %21 = vector.broadcast %20 : vector<1x256xf32> to vector<8x256xf32>
    %22 = arith.addf %19, %21 : vector<8x256xf32>
    %cst_17 = arith.constant 0.000000e+00 : f32
    %23 = vector.broadcast %cst_17 : f32 to vector<8x256xf32>
    %24 = arith.maximumf %22, %23 : vector<8x256xf32>
    %c0_18 = arith.constant 0 : index
    %c0_19 = arith.constant 0 : index
    %25 = vector.load %arg8[%c0_18, %c0_19] : memref<256x128xbf16, #tpu.memory_space<vmem>>, vector<256x128xbf16>
    %26 = arith.extf %25 : vector<256x128xbf16> to vector<256x128xf32>
    %cst_20 = arith.constant dense<0.000000e+00> : vector<8x128xf32>
    %27 = tpu.matmul %24, %26, %cst_20 {dimension_numbers = #tpu.dot_dimension_numbers<[1], [0], [0], [1], [0, 0, 1, 1], [], []>} : vector<8x256xf32>, vector<256x128xf32>, vector<8x128xf32> -> vector<8x128xf32>
    %c0_21 = arith.constant 0 : index
    %c0_22 = arith.constant 0 : index
    %28 = vector.load %arg9[%c0_21, %c0_22] : memref<1x128xf32, #tpu.memory_space<vmem>>, vector<1x128xf32>
    %29 = vector.broadcast %28 : vector<1x128xf32> to vector<8x128xf32>
    %30 = arith.addf %27, %29 : vector<8x128xf32>
    %31 = tpu.iota {dimensions = array<i32: 1>} : vector<8x128xi32>
    %c4_i32 = arith.constant 4 : i32
    %32 = vector.broadcast %c4_i32 : i32 to vector<8x128xi32>
    %33 = arith.cmpi sge, %31, %32 : vector<8x128xi32>
    %c8_i32 = arith.constant 8 : i32
    %34 = vector.broadcast %c8_i32 : i32 to vector<8x128xi32>
    %35 = arith.cmpi slt, %31, %34 : vector<8x128xi32>
    %36 = arith.andi %33, %35 : vector<8x128xi1>
    %cst_23 = arith.constant -2.000000e+01 : f32
    %cst_24 = arith.constant 2.000000e+00 : f32
    %37 = vector.broadcast %cst_23 : f32 to vector<8x128xf32>
    %38 = arith.maximumf %37, %30 : vector<8x128xf32>
    %39 = vector.broadcast %cst_24 : f32 to vector<8x128xf32>
    %40 = arith.minimumf %39, %38 : vector<8x128xf32>
    %41 = arith.select %36, %40, %30 : vector<8x128xi1>, vector<8x128xf32>
    %c0_25 = arith.constant 0 : index
    %c0_26 = arith.constant 0 : index
    %42 = vector.load %arg10[%c0_25, %c0_26] : memref<8x128xf32, #tpu.memory_space<vmem>>, vector<8x128xf32>
    tpu.vector_store %arg10[%c0_25, %c0_26], %41 {strides = array<i32>} : memref<8x128xf32, #tpu.memory_space<vmem>>, vector<8x128xf32>,
    return
  }
  func.func @transform_0(%arg0: i32) -> (i32, i32) {
    %c0_i32 = arith.constant 0 : i32
    %c0_i32_0 = arith.constant 0 : i32
    return %arg0, %c0_i32 : i32, i32
  }
  func.func @transform_1(%arg0: i32) -> (i32, i32) {
    %c0_i32 = arith.constant 0 : i32
    %c0_i32_0 = arith.constant 0 : i32
    %c0_i32_1 = arith.constant 0 : i32
    return %c0_i32, %c0_i32_0 : i32, i32
  }
  func.func @transform_2(%arg0: i32) -> (i32, i32) {
    %c0_i32 = arith.constant 0 : i32
    %c0_i32_0 = arith.constant 0 : i32
    %c0_i32_1 = arith.constant 0 : i32
    return %c0_i32, %c0_i32_0 : i32, i32
  }
  func.func @transform_3(%arg0: i32) -> (i32, i32) {
    %c0_i32 = arith.constant 0 : i32
    %c0_i32_0 = arith.constant 0 : i32
    %c0_i32_1 = arith.constant 0 : i32
    return %c0_i32, %c0_i32_0 : i32, i32
  }
  func.func @transform_4(%arg0: i32) -> (i32, i32) {
    %c0_i32 = arith.constant 0 : i32
    %c0_i32_0 = arith.constant 0 : i32
    %c0_i32_1 = arith.constant 0 : i32
    return %c0_i32, %c0_i32_0 : i32, i32
  }
  func.func @transform_5(%arg0: i32) -> (i32, i32) {
    %c0_i32 = arith.constant 0 : i32
    %c0_i32_0 = arith.constant 0 : i32
    %c0_i32_1 = arith.constant 0 : i32
    return %c0_i32, %c0_i32_0 : i32, i32
  }
  func.func @transform_6(%arg0: i32) -> (i32, i32) {
    %c0_i32 = arith.constant 0 : i32
    %c0_i32_0 = arith.constant 0 : i32
    %c0_i32_1 = arith.constant 0 : i32
    return %c0_i32, %c0_i32_0 : i32, i32
  }
  func.func @transform_7(%arg0: i32) -> (i32, i32) {
    %c0_i32 = arith.constant 0 : i32
    %c0_i32_0 = arith.constant 0 : i32
    %c0_i32_1 = arith.constant 0 : i32
    return %c0_i32, %c0_i32_0 : i32, i32
  }
  func.func @transform_8(%arg0: i32) -> (i32, i32) {
    %c0_i32 = arith.constant 0 : i32
    %c0_i32_0 = arith.constant 0 : i32
    %c0_i32_1 = arith.constant 0 : i32
    return %c0_i32, %c0_i32_0 : i32, i32
  }
  func.func @transform_9(%arg0: i32) -> (i32, i32) {
    %c0_i32 = arith.constant 0 : i32
    %c0_i32_0 = arith.constant 0 : i32
    return %arg0, %c0_i32 : i32, i32
  }
}

</mosaic_0001>

<llo_original>
// kernel: tpu_custom_call.1
$region0: #{tpu_custom_call.1}
  #allocation0 [shape = 'u32[]', space=smem, size = 0x4, offset = 0x4, fixed_abs, tag = 'smem constant byte address 0x4 - core index']
  #allocation1 [shape = 'u32[144,128]{1,0:T(1,128)}', space=vmem, size = 0x12000, scoped, tag = 'internal scratch']
  %s0 = inlined_call_operand.hbm [shape: f32[8,128], index: 0, kind: input, shape index: {}]
  %s1 = inlined_call_operand.hbm [shape: bf16[128,256], index: 1, kind: input, shape index: {}]
  %s2 = inlined_call_operand.vmem [shape: f32[1,256], index: 2, kind: input, shape index: {}]
  %s3 = inlined_call_operand.hbm [shape: bf16[256,256], index: 3, kind: input, shape index: {}]
  %s4 = inlined_call_operand.vmem [shape: f32[1,256], index: 4, kind: input, shape index: {}]
  %s5 = inlined_call_operand.hbm [shape: bf16[256,256], index: 5, kind: input, shape index: {}]
  %s6 = inlined_call_operand.vmem [shape: f32[1,256], index: 6, kind: input, shape index: {}]
  %s7 = inlined_call_operand.hbm [shape: bf16[256,128], index: 7, kind: input, shape index: {}]
  %s8 = inlined_call_operand.vmem [shape: f32[1,128], index: 8, kind: input, shape index: {}]
  %s9 = inlined_call_operand.hbm [shape: f32[8,128], index: 9, kind: output, shape index: {}]
  %s10 = sld [smem:[#allocation0]]
  $region66: #{tpu_custom_call.1} parent=0
    _
  %s12 = ssub.s32 1, %s10
  %s13 = scalar_select 0, %s12, %s10
  $region1: #{tpu_custom_call.1} parent=0
    #allocation2 [shape = 'u8[4096]{0}', space=vmem, size = 0x1000, scoped, tag = 'input window, operand 0, single buffered']
    #allocation3 [shape = 's32[1]{0}', space=sflag, size = 0x4, scoped, tag = 'scoped memory for tpu_custom_call.1']
    #allocation4 [shape = 's32[1]{0}', space=sflag, size = 0x4, scoped, tag = 'scoped memory for tpu_custom_call.1']
    #allocation5 [shape = 'u8[65536]{0}', space=vmem, size = 0x10000, scoped, tag = 'input window, operand 1, single buffered']
    #allocation6 [shape = 's32[1]{0}', space=sflag, size = 0x4, scoped, tag = 'scoped memory for tpu_custom_call.1']
    #allocation7 [shape = 'u8[131072]{0}', space=vmem, size = 0x20000, scoped, tag = 'input window, operand 3, single buffered']
    #allocation8 [shape = 'u8[131072]{0}', space=vmem, size = 0x20000, scoped, tag = 'input window, operand 5, single buffered']
    #allocation9 [shape = 's32[1]{0}', space=sflag, size = 0x4, scoped, tag = 'scoped memory for tpu_custom_call.1']
    #allocation10 [shape = 'u8[65536]{0}', space=vmem, size = 0x10000, scoped, tag = 'input window, operand 7, single buffered']
    #allocation11 [shape = 'u8[4096]{0}', space=vmem, size = 0x1000, scoped, tag = 'output window, operand 0, single buffered']
    %14 = vsyncpa [#allocation3], 0
    %15 = vsyncpa [#allocation6], 0
    %16 = vsyncpa [#allocation9], 0
    %17 = vsyncpa [#allocation4], 0
    // Predicated region
    $region2: #{tpu_custom_call.1} parent=1 // pred_check
      _
    $region3: #{tpu_custom_call.1} parent=1 // pred_check_branch
      %19 = sbr.rel (0) target = $region5
    $region4: #{tpu_custom_call.1} parent=1 // pred_region
      %s21 = ssub.s32 128, 128
      %22 = vsyncadd [#allocation3], %s21
      %s24 = sshll.u32 [#allocation2], 4
      %s25 = int_to_ptr.vmem [resolvable:$true] %s24
      %27 = dma.hbm_to_vmem [thread:$0]  %s0, 128, %s25, [#allocation3]
    $region5: #{tpu_custom_call.1} parent=1 // pred_fallthru
      _
    // Predicated region
    $region6: #{tpu_custom_call.1} parent=1 // pred_check
      _
    $region7: #{tpu_custom_call.1} parent=1 // pred_check_branch
      %29 = sbr.rel (0) target = $region9
    $region8: #{tpu_custom_call.1} parent=1 // pred_region
      %s31 = ssub.s32 2048, 2048
      %32 = vsyncadd [#allocation6], %s31
      %s33 = sshll.u32 [#allocation5], 4
      %s34 = int_to_ptr.vmem [resolvable:$true] %s33
      %39 = dma.hbm_to_vmem [thread:$0]  %s1, 2048, %s34, [#allocation6], 128, 128, 8
    $region9: #{tpu_custom_call.1} parent=1 // pred_fallthru
      _
    // Predicated region
    $region10: #{tpu_custom_call.1} parent=1 // pred_check
      _
    $region11: #{tpu_custom_call.1} parent=1 // pred_check_branch
      %41 = sbr.rel (0) target = $region13
    $region12: #{tpu_custom_call.1} parent=1 // pred_region
      _
    $region13: #{tpu_custom_call.1} parent=1 // pred_fallthru
      _
    // Predicated region
    $region14: #{tpu_custom_call.1} parent=1 // pred_check
      _
    $region15: #{tpu_custom_call.1} parent=1 // pred_check_branch
      %43 = sbr.rel (0) target = $region17
    $region16: #{tpu_custom_call.1} parent=1 // pred_region
      %s45 = ssub.s32 4096, 4096
      %46 = vsyncadd [#allocation6], %s45
      %s47 = sshll.u32 [#allocation7], 4
      %s48 = int_to_ptr.vmem [resolvable:$true] %s47
      %53 = dma.hbm_to_vmem [thread:$0]  %s3, 4096, %s48, [#allocation6], 128, 128, 8
    $region17: #{tpu_custom_call.1} parent=1 // pred_fallthru
      _
    // Predicated region
    $region18: #{tpu_custom_call.1} parent=1 // pred_check
      _
    $region19: #{tpu_custom_call.1} parent=1 // pred_check_branch
      %55 = sbr.rel (0) target = $region21
    $region20: #{tpu_custom_call.1} parent=1 // pred_region
      _
    $region21: #{tpu_custom_call.1} parent=1 // pred_fallthru
      _
    // Predicated region
    $region22: #{tpu_custom_call.1} parent=1 // pred_check
      _
    $region23: #{tpu_custom_call.1} parent=1 // pred_check_branch
      %57 = sbr.rel (0) target = $region25
    $region24: #{tpu_custom_call.1} parent=1 // pred_region
      %s59 = ssub.s32 4096, 4096
      %60 = vsyncadd [#allocation9], %s59
      %s61 = sshll.u32 [#allocation8], 4
      %s62 = int_to_ptr.vmem [resolvable:$true] %s61
      %67 = dma.hbm_to_vmem [thread:$0]  %s5, 4096, %s62, [#allocation9], 128, 128, 8
    $region25: #{tpu_custom_call.1} parent=1 // pred_fallthru
      _
    // Predicated region
    $region26: #{tpu_custom_call.1} parent=1 // pred_check
      _
    $region27: #{tpu_custom_call.1} parent=1 // pred_check_branch
      %69 = sbr.rel (0) target = $region29
    $region28: #{tpu_custom_call.1} parent=1 // pred_region
      _
    $region29: #{tpu_custom_call.1} parent=1 // pred_fallthru
      _
    // Predicated region
    $region30: #{tpu_custom_call.1} parent=1 // pred_check
      _
    $region31: #{tpu_custom_call.1} parent=1 // pred_check_branch
      %71 = sbr.rel (0) target = $region33
    $region32: #{tpu_custom_call.1} parent=1 // pred_region
      %s73 = ssub.s32 2048, 2048
      %74 = vsyncadd [#allocation9], %s73
      %s75 = sshll.u32 [#allocation10], 4
      %s76 = int_to_ptr.vmem [resolvable:$true] %s75
      %81 = dma.hbm_to_vmem [thread:$0]  %s7, 2048, %s76, [#allocation9], 64, 64, 4
    $region33: #{tpu_custom_call.1} parent=1 // pred_fallthru
      _
    // Predicated region
    $region34: #{tpu_custom_call.1} parent=1 // pred_check
      _
    $region35: #{tpu_custom_call.1} parent=1 // pred_check_branch
      %83 = sbr.rel (0) target = $region37
    $region36: #{tpu_custom_call.1} parent=1 // pred_region
      _
    $region37: #{tpu_custom_call.1} parent=1 // pred_fallthru
      _
    // Predicated region
    $region38: #{tpu_custom_call.1} parent=1 // pred_check
      _
    $region39: #{tpu_custom_call.1} parent=1 // pred_check_branch
      %85 = sbr.rel (0) target = $region41
    $region40: #{tpu_custom_call.1} parent=1 // pred_region
      %86 = dma.done [#allocation3], 128
    $region41: #{tpu_custom_call.1} parent=1 // pred_fallthru
      _
    // Predicated region
    $region42: #{tpu_custom_call.1} parent=1 // pred_check
      _
    $region43: #{tpu_custom_call.1} parent=1 // pred_check_branch
      %88 = sbr.rel (0) target = $region45
    $region44: #{tpu_custom_call.1} parent=1 // pred_region
      %89 = dma.done [#allocation6], 2048
    $region45: #{tpu_custom_call.1} parent=1 // pred_fallthru
      _
    // Predicated region
    $region46: #{tpu_custom_call.1} parent=1 // pred_check
      _
    $region47: #{tpu_custom_call.1} parent=1 // pred_check_branch
      %91 = sbr.rel (0) target = $region49
    $region48: #{tpu_custom_call.1} parent=1 // pred_region
      %92 = dma.done [#allocation6], 4096
    $region49: #{tpu_custom_call.1} parent=1 // pred_fallthru
      _
    // Predicated region
    $region50: #{tpu_custom_call.1} parent=1 // pred_check
      _
    $region51: #{tpu_custom_call.1} parent=1 // pred_check_branch
      %94 = sbr.rel (0) target = $region53
    $region52: #{tpu_custom_call.1} parent=1 // pred_region
      %95 = dma.done [#allocation9], 4096
    $region53: #{tpu_custom_call.1} parent=1 // pred_fallthru
      _
    // Predicated region
    $region54: #{tpu_custom_call.1} parent=1 // pred_check
      _
    $region55: #{tpu_custom_call.1} parent=1 // pred_check_branch
      %97 = sbr.rel (0) target = $region57
    $region56: #{tpu_custom_call.1} parent=1 // pred_region
      %98 = dma.done [#allocation9], 2048
    $region57: #{tpu_custom_call.1} parent=1 // pred_fallthru
      _
    %v99 = vld [vmem:[#allocation2] sm:$0xff]
    %v100 = vld [vmem:[#allocation5] sm:$0xff]
    %v101 = vld [vmem:[#allocation5 + $0x8] sm:$0xff]
    %v102 = vld [vmem:[#allocation5 + $0x10] sm:$0xff]
    %v103 = vld [vmem:[#allocation5 + $0x18] sm:$0xff]
    %v104 = vld [vmem:[#allocation5 + $0x20] sm:$0xff]
    %v105 = vld [vmem:[#allocation5 + $0x28] sm:$0xff]
    %v106 = vld [vmem:[#allocation5 + $0x30] sm:$0xff]
    %v107 = vld [vmem:[#allocation5 + $0x38] sm:$0xff]
    %v108 = vld [vmem:[#allocation5 + $0x40] sm:$0xff]
    %v109 = vld [vmem:[#allocation5 + $0x48] sm:$0xff]
    %v110 = vld [vmem:[#allocation5 + $0x50] sm:$0xff]
    %v111 = vld [vmem:[#allocation5 + $0x58] sm:$0xff]
    %v112 = vld [vmem:[#allocation5 + $0x60] sm:$0xff]
    %v113 = vld [vmem:[#allocation5 + $0x68] sm:$0xff]
    %v114 = vld [vmem:[#allocation5 + $0x70] sm:$0xff]
    %v115 = vld [vmem:[#allocation5 + $0x78] sm:$0xff]
    %v116 = vunpack.c.l.bf16 %v100
    %v117 = vunpack.c.h.bf16 %v100
    %v118 = vunpack.c.l.bf16 %v101
    %v119 = vunpack.c.h.bf16 %v101
    %v120 = vunpack.c.l.bf16 %v102
    %v121 = vunpack.c.h.bf16 %v102
    %v122 = vunpack.c.l.bf16 %v103
    %v123 = vunpack.c.h.bf16 %v103
    %v124 = vunpack.c.l.bf16 %v104
    %v125 = vunpack.c.h.bf16 %v104
    %v126 = vunpack.c.l.bf16 %v105
    %v127 = vunpack.c.h.bf16 %v105
    %v128 = vunpack.c.l.bf16 %v106
    %v129 = vunpack.c.h.bf16 %v106
    %v130 = vunpack.c.l.bf16 %v107
    %v131 = vunpack.c.h.bf16 %v107
    %v132 = vunpack.c.l.bf16 %v108
    %v133 = vunpack.c.h.bf16 %v108
    %v134 = vunpack.c.l.bf16 %v109
    %v135 = vunpack.c.h.bf16 %v109
    %v136 = vunpack.c.l.bf16 %v110
    %v137 = vunpack.c.h.bf16 %v110
    %v138 = vunpack.c.l.bf16 %v111
    %v139 = vunpack.c.h.bf16 %v111
    %v140 = vunpack.c.l.bf16 %v112
    %v141 = vunpack.c.h.bf16 %v112
    %v142 = vunpack.c.l.bf16 %v113
    %v143 = vunpack.c.h.bf16 %v113
    %v144 = vunpack.c.l.bf16 %v114
    %v145 = vunpack.c.h.bf16 %v114
    %v146 = vunpack.c.l.bf16 %v115
    %v147 = vunpack.c.h.bf16 %v115
    %v148 = vld [vmem:[%s2] sm:$0x3]
    %v150 = vlaneseq
    %v151 = vshrl.u32 %v150, 7
    %v152 = vsub.s32 0, %v151
    %v153 = vrot.slane %v148, %v152
    %v154 = vlaneseq
    %v155 = vshrl.u32 %v154, 7
    %v156 = vsub.s32 1, %v155
    %v157 = vrot.slane %v148, %v156
    %160 = vmatprep.subr.mxu0 %v147
    %161 = vmatpush1.msra.mxu0 %v146
    %162 = vmatprep.subr.mxu0 %v145
    %163 = vmatpush1.msra.mxu0 %v144
    %164 = vmatprep.subr.mxu0 %v143
    %165 = vmatpush1.msra.mxu0 %v142
    %166 = vmatprep.subr.mxu0 %v141
    %167 = vmatpush1.msra.mxu0 %v140
    %168 = vmatprep.subr.mxu0 %v139
    %169 = vmatpush1.msra.mxu0 %v138
    %170 = vmatprep.subr.mxu0 %v137
    %171 = vmatpush1.msra.mxu0 %v136
    %172 = vmatprep.subr.mxu0 %v135
    %173 = vmatpush1.msra.mxu0 %v134
    %174 = vmatprep.subr.mxu0 %v133
    %175 = vmatpush1.msra.mxu0 %v132
    %176 = vmatprep.subr.mxu0 %v131
    %177 = vmatpush1.msra.mxu0 %v130
    %178 = vmatprep.subr.mxu0 %v129
    %179 = vmatpush1.msra.mxu0 %v128
    %180 = vmatprep.subr.mxu0 %v127
    %181 = vmatpush1.msra.mxu0 %v126
    %182 = vmatprep.subr.mxu0 %v125
    %183 = vmatpush1.msra.mxu0 %v124
    %184 = vmatprep.subr.mxu0 %v123
    %185 = vmatpush1.msra.mxu0 %v122
    %186 = vmatprep.subr.mxu0 %v121
    %187 = vmatpush1.msra.mxu0 %v120
    %188 = vmatprep.subr.mxu0 %v119
    %189 = vmatpush1.msra.mxu0 %v118
    %190 = vmatprep.subr.mxu0 %v117
    %191 = vmatpush1.msra.mxu0 %v116
    %192 = vmatprep.subr.mxu0 0.0
    %193 = vmatpush2.msra.mxu0 0.0
    %194 = vmatprep.subr.mxu0 0.0
    %195 = vmatpush2.msra.mxu0 0.0
    %196 = vmatprep.subr.mxu0 0.0
    %197 = vmatpush2.msra.mxu0 0.0
    %198 = vmatprep.subr.mxu0 0.0
    %199 = vmatpush2.msra.mxu0 0.0
    %200 = vmatprep.subr.mxu0 0.0
    %201 = vmatpush2.msra.mxu0 0.0
    %202 = vmatprep.subr.mxu0 0.0
    %203 = vmatpush2.msra.mxu0 0.0
    %204 = vmatprep.subr.mxu0 0.0
    %205 = vmatpush2.msra.mxu0 0.0
    %206 = vmatprep.subr.mxu0 0.0
    %207 = vmatpush2.msra.mxu0 0.0
    %208 = vmatprep.subr.mxu0 0.0
    %209 = vmatpush2.msra.mxu0 0.0
    %210 = vmatprep.subr.mxu0 0.0
    %211 = vmatpush2.msra.mxu0 0.0
    %212 = vmatprep.subr.mxu0 0.0
    %213 = vmatpush2.msra.mxu0 0.0
    %214 = vmatprep.subr.mxu0 0.0
    %215 = vmatpush2.msra.mxu0 0.0
    %216 = vmatprep.subr.mxu0 0.0
    %217 = vmatpush2.msra.mxu0 0.0
    %218 = vmatprep.subr.mxu0 0.0
    %219 = vmatpush2.msra.mxu0 0.0
    %220 = vmatprep.subr.mxu0 0.0
    %221 = vmatpush2.msra.mxu0 0.0
    %222 = vmatprep.subr.mxu0 0.0
    %223 = vmatpush2.msra.mxu0 0.0
    %224 = vmatprep.mubr.f32.mxu0 0.0
    %225 = vmatmul.mubr.f32.gmra.mxu0 %v99
    %v226 = vpop.f32.mrf.mxu0
    %v227 = vadd.f32 %v153, %v226
    %v228 = vpop.f32.mrf.mxu0
    %v229 = vadd.f32 %v157, %v228
    %230 = vdwg.mxu0
    %v231 = vmax.f32 %v227, 0.0
    %v232 = vmax.f32 %v229, 0.0
    %v233 = vld [vmem:[#allocation7] sm:$0xff]
    %v234 = vld [vmem:[#allocation7 + $0x8] sm:$0xff]
    %v235 = vld [vmem:[#allocation7 + $0x10] sm:$0xff]
    %v236 = vld [vmem:[#allocation7 + $0x18] sm:$0xff]
    %v237 = vld [vmem:[#allocation7 + $0x20] sm:$0xff]
    %v238 = vld [vmem:[#allocation7 + $0x28] sm:$0xff]
    %v239 = vld [vmem:[#allocation7 + $0x30] sm:$0xff]
    %v240 = vld [vmem:[#allocation7 + $0x38] sm:$0xff]
    %v241 = vld [vmem:[#allocation7 + $0x40] sm:$0xff]
    %v242 = vld [vmem:[#allocation7 + $0x48] sm:$0xff]
    %v243 = vld [vmem:[#allocation7 + $0x50] sm:$0xff]
    %v244 = vld [vmem:[#allocation7 + $0x58] sm:$0xff]
    %v245 = vld [vmem:[#allocation7 + $0x60] sm:$0xff]
    %v246 = vld [vmem:[#allocation7 + $0x68] sm:$0xff]
    %v247 = vld [vmem:[#allocation7 + $0x70] sm:$0xff]
    %v248 = vld [vmem:[#allocation7 + $0x78] sm:$0xff]
    %v249 = vld [vmem:[#allocation7 + $0x80] sm:$0xff]
    %v250 = vld [vmem:[#allocation7 + $0x88] sm:$0xff]
    %v251 = vld [vmem:[#allocation7 + $0x90] sm:$0xff]
    %v252 = vld [vmem:[#allocation7 + $0x98] sm:$0xff]
    %v253 = vld [vmem:[#allocation7 + $0xa0] sm:$0xff]
    %v254 = vld [vmem:[#allocation7 + $0xa8] sm:$0xff]
    %v255 = vld [vmem:[#allocation7 + $0xb0] sm:$0xff]
    %v256 = vld [vmem:[#allocation7 + $0xb8] sm:$0xff]
    %v257 = vld [vmem:[#allocation7 + $0xc0] sm:$0xff]
    %v258 = vld [vmem:[#allocation7 + $0xc8] sm:$0xff]
    %v259 = vld [vmem:[#allocation7 + $0xd0] sm:$0xff]
    %v260 = vld [vmem:[#allocation7 + $0xd8] sm:$0xff]
    %v261 = vld [vmem:[#allocation7 + $0xe0] sm:$0xff]
    %v262 = vld [vmem:[#allocation7 + $0xe8] sm:$0xff]
    %v263 = vld [vmem:[#allocation7 + $0xf0] sm:$0xff]
    %v264 = vld [vmem:[#allocation7 + $0xf8] sm:$0xff]
    %v265 = vunpack.c.l.bf16 %v233
    %v266 = vunpack.c.h.bf16 %v233
    %v267 = vunpack.c.l.bf16 %v234
    %v268 = vunpack.c.h.bf16 %v234
    %v269 = vunpack.c.l.bf16 %v235
    %v270 = vunpack.c.h.bf16 %v235
    %v271 = vunpack.c.l.bf16 %v236
    %v272 = vunpack.c.h.bf16 %v236
    %v273 = vunpack.c.l.bf16 %v237
    %v274 = vunpack.c.h.bf16 %v237
    %v275 = vunpack.c.l.bf16 %v238
    %v276 = vunpack.c.h.bf16 %v238
    %v277 = vunpack.c.l.bf16 %v239
    %v278 = vunpack.c.h.bf16 %v239
    %v279 = vunpack.c.l.bf16 %v240
    %v280 = vunpack.c.h.bf16 %v240
    %v281 = vunpack.c.l.bf16 %v241
    %v282 = vunpack.c.h.bf16 %v241
    %v283 = vunpack.c.l.bf16 %v242
    %v284 = vunpack.c.h.bf16 %v242
    %v285 = vunpack.c.l.bf16 %v243
    %v286 = vunpack.c.h.bf16 %v243
    %v287 = vunpack.c.l.bf16 %v244
    %v288 = vunpack.c.h.bf16 %v244
    %v289 = vunpack.c.l.bf16 %v245
    %v290 = vunpack.c.h.bf16 %v245
    %v291 = vunpack.c.l.bf16 %v246
    %v292 = vunpack.c.h.bf16 %v246
    %v293 = vunpack.c.l.bf16 %v247
    %v294 = vunpack.c.h.bf16 %v247
    %v295 = vunpack.c.l.bf16 %v248
    %v296 = vunpack.c.h.bf16 %v248
    %v297 = vunpack.c.l.bf16 %v249
    %v298 = vunpack.c.h.bf16 %v249
    %v299 = vunpack.c.l.bf16 %v250
    %v300 = vunpack.c.h.bf16 %v250
    %v301 = vunpack.c.l.bf16 %v251
    %v302 = vunpack.c.h.bf16 %v251
    %v303 = vunpack.c.l.bf16 %v252
    %v304 = vunpack.c.h.bf16 %v252
    %v305 = vunpack.c.l.bf16 %v253
    %v306 = vunpack.c.h.bf16 %v253
    %v307 = vunpack.c.l.bf16 %v254
    %v308 = vunpack.c.h.bf16 %v254
    %v309 = vunpack.c.l.bf16 %v255
    %v310 = vunpack.c.h.bf16 %v255
    %v311 = vunpack.c.l.bf16 %v256
    %v312 = vunpack.c.h.bf16 %v256
    %v313 = vunpack.c.l.bf16 %v257
    %v314 = vunpack.c.h.bf16 %v257
    %v315 = vunpack.c.l.bf16 %v258
    %v316 = vunpack.c.h.bf16 %v258
    %v317 = vunpack.c.l.bf16 %v259
    %v318 = vunpack.c.h.bf16 %v259
    %v319 = vunpack.c.l.bf16 %v260
    %v320 = vunpack.c.h.bf16 %v260
    %v321 = vunpack.c.l.bf16 %v261
    %v322 = vunpack.c.h.bf16 %v261
    %v323 = vunpack.c.l.bf16 %v262
    %v324 = vunpack.c.h.bf16 %v262
    %v325 = vunpack.c.l.bf16 %v263
    %v326 = vunpack.c.h.bf16 %v263
    %v327 = vunpack.c.l.bf16 %v264
    %v328 = vunpack.c.h.bf16 %v264
    %v329 = vld [vmem:[%s4] sm:$0x3]
    %v331 = vlaneseq
    %v332 = vshrl.u32 %v331, 7
    %v333 = vsub.s32 0, %v332
    %v334 = vrot.slane %v329, %v333
    %v335 = vlaneseq
    %v336 = vshrl.u32 %v335, 7
    %v337 = vsub.s32 1, %v336
    %v338 = vrot.slane %v329, %v337
    %341 = vmatprep.subr.mxu0 %v296
    %342 = vmatpush1.msra.mxu0 %v295
    %343 = vmatprep.subr.mxu0 %v294
    %344 = vmatpush1.msra.mxu0 %v293
    %345 = vmatprep.subr.mxu0 %v292
    %346 = vmatpush1.msra.mxu0 %v291
    %347 = vmatprep.subr.mxu0 %v290
    %348 = vmatpush1.msra.mxu0 %v289
    %349 = vmatprep.subr.mxu0 %v288
    %350 = vmatpush1.msra.mxu0 %v287
    %351 = vmatprep.subr.mxu0 %v286
    %352 = vmatpush1.msra.mxu0 %v285
    %353 = vmatprep.subr.mxu0 %v284
    %354 = vmatpush1.msra.mxu0 %v283
    %355 = vmatprep.subr.mxu0 %v282
    %356 = vmatpush1.msra.mxu0 %v281
    %357 = vmatprep.subr.mxu0 %v280
    %358 = vmatpush1.msra.mxu0 %v279
    %359 = vmatprep.subr.mxu0 %v278
    %360 = vmatpush1.msra.mxu0 %v277
    %361 = vmatprep.subr.mxu0 %v276
    %362 = vmatpush1.msra.mxu0 %v275
    %363 = vmatprep.subr.mxu0 %v274
    %364 = vmatpush1.msra.mxu0 %v273
    %365 = vmatprep.subr.mxu0 %v272
    %366 = vmatpush1.msra.mxu0 %v271
    %367 = vmatprep.subr.mxu0 %v270
    %368 = vmatpush1.msra.mxu0 %v269
    %369 = vmatprep.subr.mxu0 %v268
    %370 = vmatpush1.msra.mxu0 %v267
    %371 = vmatprep.subr.mxu0 %v266
    %372 = vmatpush1.msra.mxu0 %v265
    %373 = vmatprep.subr.mxu0 %v328
    %374 = vmatpush2.msra.mxu0 %v327
    %375 = vmatprep.subr.mxu0 %v326
    %376 = vmatpush2.msra.mxu0 %v325
    %377 = vmatprep.subr.mxu0 %v324
    %378 = vmatpush2.msra.mxu0 %v323
    %379 = vmatprep.subr.mxu0 %v322
    %380 = vmatpush2.msra.mxu0 %v321
    %381 = vmatprep.subr.mxu0 %v320
    %382 = vmatpush2.msra.mxu0 %v319
    %383 = vmatprep.subr.mxu0 %v318
    %384 = vmatpush2.msra.mxu0 %v317
    %385 = vmatprep.subr.mxu0 %v316
    %386 = vmatpush2.msra.mxu0 %v315
    %387 = vmatprep.subr.mxu0 %v314
    %388 = vmatpush2.msra.mxu0 %v313
    %389 = vmatprep.subr.mxu0 %v312
    %390 = vmatpush2.msra.mxu0 %v311
    %391 = vmatprep.subr.mxu0 %v310
    %392 = vmatpush2.msra.mxu0 %v309
    %393 = vmatprep.subr.mxu0 %v308
    %394 = vmatpush2.msra.mxu0 %v307
    %395 = vmatprep.subr.mxu0 %v306
    %396 = vmatpush2.msra.mxu0 %v305
    %397 = vmatprep.subr.mxu0 %v304
    %398 = vmatpush2.msra.mxu0 %v303
    %399 = vmatprep.subr.mxu0 %v302
    %400 = vmatpush2.msra.mxu0 %v301
    %401 = vmatprep.subr.mxu0 %v300
    %402 = vmatpush2.msra.mxu0 %v299
    %403 = vmatprep.subr.mxu0 %v298
    %404 = vmatpush2.msra.mxu0 %v297
    %405 = vmatprep.mubr.f32.mxu0 %v232
    %406 = vmatmul.mubr.f32.gmra.mxu0 %v231
    %v407 = vpop.f32.mrf.mxu0
    %v408 = vadd.f32 %v334, %v407
    %v409 = vpop.f32.mrf.mxu0
    %v410 = vadd.f32 %v338, %v409
    %411 = vdwg.mxu0
    %v412 = vmax.f32 %v408, 0.0
    %v413 = vmax.f32 %v410, 0.0
    %v414 = vld [vmem:[#allocation8] sm:$0xff]
    %v415 = vld [vmem:[#allocation8 + $0x8] sm:$0xff]
    %v416 = vld [vmem:[#allocation8 + $0x10] sm:$0xff]
    %v417 = vld [vmem:[#allocation8 + $0x18] sm:$0xff]
    %v418 = vld [vmem:[#allocation8 + $0x20] sm:$0xff]
    %v419 = vld [vmem:[#allocation8 + $0x28] sm:$0xff]
    %v420 = vld [vmem:[#allocation8 + $0x30] sm:$0xff]
    %v421 = vld [vmem:[#allocation8 + $0x38] sm:$0xff]
    %v422 = vld [vmem:[#allocation8 + $0x40] sm:$0xff]
    %v423 = vld [vmem:[#allocation8 + $0x48] sm:$0xff]
    %v424 = vld [vmem:[#allocation8 + $0x50] sm:$0xff]
    %v425 = vld [vmem:[#allocation8 + $0x58] sm:$0xff]
    %v426 = vld [vmem:[#allocation8 + $0x60] sm:$0xff]
    %v427 = vld [vmem:[#allocation8 + $0x68] sm:$0xff]
    %v428 = vld [vmem:[#allocation8 + $0x70] sm:$0xff]
    %v429 = vld [vmem:[#allocation8 + $0x78] sm:$0xff]
    %v430 = vld [vmem:[#allocation8 + $0x80] sm:$0xff]
    %v431 = vld [vmem:[#allocation8 + $0x88] sm:$0xff]
    %v432 = vld [vmem:[#allocation8 + $0x90] sm:$0xff]
    %v433 = vld [vmem:[#allocation8 + $0x98] sm:$0xff]
    %v434 = vld [vmem:[#allocation8 + $0xa0] sm:$0xff]
    %v435 = vld [vmem:[#allocation8 + $0xa8] sm:$0xff]
    %v436 = vld [vmem:[#allocation8 + $0xb0] sm:$0xff]
    %v437 = vld [vmem:[#allocation8 + $0xb8] sm:$0xff]
    %v438 = vld [vmem:[#allocation8 + $0xc0] sm:$0xff]
    %v439 = vld [vmem:[#allocation8 + $0xc8] sm:$0xff]
    %v440 = vld [vmem:[#allocation8 + $0xd0] sm:$0xff]
    %v441 = vld [vmem:[#allocation8 + $0xd8] sm:$0xff]
    %v442 = vld [vmem:[#allocation8 + $0xe0] sm:$0xff]
    %v443 = vld [vmem:[#allocation8 + $0xe8] sm:$0xff]
    %v444 = vld [vmem:[#allocation8 + $0xf0] sm:$0xff]
    %v445 = vld [vmem:[#allocation8 + $0xf8] sm:$0xff]
    %v446 = vunpack.c.l.bf16 %v414
    %v447 = vunpack.c.h.bf16 %v414
    %v448 = vunpack.c.l.bf16 %v415
    %v449 = vunpack.c.h.bf16 %v415
    %v450 = vunpack.c.l.bf16 %v416
    %v451 = vunpack.c.h.bf16 %v416
    %v452 = vunpack.c.l.bf16 %v417
    %v453 = vunpack.c.h.bf16 %v417
    %v454 = vunpack.c.l.bf16 %v418
    %v455 = vunpack.c.h.bf16 %v418
    %v456 = vunpack.c.l.bf16 %v419
    %v457 = vunpack.c.h.bf16 %v419
    %v458 = vunpack.c.l.bf16 %v420
    %v459 = vunpack.c.h.bf16 %v420
    %v460 = vunpack.c.l.bf16 %v421
    %v461 = vunpack.c.h.bf16 %v421
    %v462 = vunpack.c.l.bf16 %v422
    %v463 = vunpack.c.h.bf16 %v422
    %v464 = vunpack.c.l.bf16 %v423
    %v465 = vunpack.c.h.bf16 %v423
    %v466 = vunpack.c.l.bf16 %v424
    %v467 = vunpack.c.h.bf16 %v424
    %v468 = vunpack.c.l.bf16 %v425
    %v469 = vunpack.c.h.bf16 %v425
    %v470 = vunpack.c.l.bf16 %v426
    %v471 = vunpack.c.h.bf16 %v426
    %v472 = vunpack.c.l.bf16 %v427
    %v473 = vunpack.c.h.bf16 %v427
    %v474 = vunpack.c.l.bf16 %v428
    %v475 = vunpack.c.h.bf16 %v428
    %v476 = vunpack.c.l.bf16 %v429
    %v477 = vunpack.c.h.bf16 %v429
    %v478 = vunpack.c.l.bf16 %v430
    %v479 = vunpack.c.h.bf16 %v430
    %v480 = vunpack.c.l.bf16 %v431
    %v481 = vunpack.c.h.bf16 %v431
    %v482 = vunpack.c.l.bf16 %v432
    %v483 = vunpack.c.h.bf16 %v432
    %v484 = vunpack.c.l.bf16 %v433
    %v485 = vunpack.c.h.bf16 %v433
    %v486 = vunpack.c.l.bf16 %v434
    %v487 = vunpack.c.h.bf16 %v434
    %v488 = vunpack.c.l.bf16 %v435
    %v489 = vunpack.c.h.bf16 %v435
    %v490 = vunpack.c.l.bf16 %v436
    %v491 = vunpack.c.h.bf16 %v436
    %v492 = vunpack.c.l.bf16 %v437
    %v493 = vunpack.c.h.bf16 %v437
    %v494 = vunpack.c.l.bf16 %v438
    %v495 = vunpack.c.h.bf16 %v438
    %v496 = vunpack.c.l.bf16 %v439
    %v497 = vunpack.c.h.bf16 %v439
    %v498 = vunpack.c.l.bf16 %v440
    %v499 = vunpack.c.h.bf16 %v440
    %v500 = vunpack.c.l.bf16 %v441
    %v501 = vunpack.c.h.bf16 %v441
    %v502 = vunpack.c.l.bf16 %v442
    %v503 = vunpack.c.h.bf16 %v442
    %v504 = vunpack.c.l.bf16 %v443
    %v505 = vunpack.c.h.bf16 %v443
    %v506 = vunpack.c.l.bf16 %v444
    %v507 = vunpack.c.h.bf16 %v444
    %v508 = vunpack.c.l.bf16 %v445
    %v509 = vunpack.c.h.bf16 %v445
    %v510 = vld [vmem:[%s6] sm:$0x3]
    %v512 = vlaneseq
    %v513 = vshrl.u32 %v512, 7
    %v514 = vsub.s32 0, %v513
    %v515 = vrot.slane %v510, %v514
    %v516 = vlaneseq
    %v517 = vshrl.u32 %v516, 7
    %v518 = vsub.s32 1, %v517
    %v519 = vrot.slane %v510, %v518
    %522 = vmatprep.subr.mxu0 %v477
    %523 = vmatpush1.msra.mxu0 %v476
    %524 = vmatprep.subr.mxu0 %v475
    %525 = vmatpush1.msra.mxu0 %v474
    %526 = vmatprep.subr.mxu0 %v473
    %527 = vmatpush1.msra.mxu0 %v472
    %528 = vmatprep.subr.mxu0 %v471
    %529 = vmatpush1.msra.mxu0 %v470
    %530 = vmatprep.subr.mxu0 %v469
    %531 = vmatpush1.msra.mxu0 %v468
    %532 = vmatprep.subr.mxu0 %v467
    %533 = vmatpush1.msra.mxu0 %v466
    %534 = vmatprep.subr.mxu0 %v465
    %535 = vmatpush1.msra.mxu0 %v464
    %536 = vmatprep.subr.mxu0 %v463
    %537 = vmatpush1.msra.mxu0 %v462
    %538 = vmatprep.subr.mxu0 %v461
    %539 = vmatpush1.msra.mxu0 %v460
    %540 = vmatprep.subr.mxu0 %v459
    %541 = vmatpush1.msra.mxu0 %v458
    %542 = vmatprep.subr.mxu0 %v457
    %543 = vmatpush1.msra.mxu0 %v456
    %544 = vmatprep.subr.mxu0 %v455
    %545 = vmatpush1.msra.mxu0 %v454
    %546 = vmatprep.subr.mxu0 %v453
    %547 = vmatpush1.msra.mxu0 %v452
    %548 = vmatprep.subr.mxu0 %v451
    %549 = vmatpush1.msra.mxu0 %v450
    %550 = vmatprep.subr.mxu0 %v449
    %551 = vmatpush1.msra.mxu0 %v448
    %552 = vmatprep.subr.mxu0 %v447
    %553 = vmatpush1.msra.mxu0 %v446
    %554 = vmatprep.subr.mxu0 %v509
    %555 = vmatpush2.msra.mxu0 %v508
    %556 = vmatprep.subr.mxu0 %v507
    %557 = vmatpush2.msra.mxu0 %v506
    %558 = vmatprep.subr.mxu0 %v505
    %559 = vmatpush2.msra.mxu0 %v504
    %560 = vmatprep.subr.mxu0 %v503
    %561 = vmatpush2.msra.mxu0 %v502
    %562 = vmatprep.subr.mxu0 %v501
    %563 = vmatpush2.msra.mxu0 %v500
    %564 = vmatprep.subr.mxu0 %v499
    %565 = vmatpush2.msra.mxu0 %v498
    %566 = vmatprep.subr.mxu0 %v497
    %567 = vmatpush2.msra.mxu0 %v496
    %568 = vmatprep.subr.mxu0 %v495
    %569 = vmatpush2.msra.mxu0 %v494
    %570 = vmatprep.subr.mxu0 %v493
    %571 = vmatpush2.msra.mxu0 %v492
    %572 = vmatprep.subr.mxu0 %v491
    %573 = vmatpush2.msra.mxu0 %v490
    %574 = vmatprep.subr.mxu0 %v489
    %575 = vmatpush2.msra.mxu0 %v488
    %576 = vmatprep.subr.mxu0 %v487
    %577 = vmatpush2.msra.mxu0 %v486
    %578 = vmatprep.subr.mxu0 %v485
    %579 = vmatpush2.msra.mxu0 %v484
    %580 = vmatprep.subr.mxu0 %v483
    %581 = vmatpush2.msra.mxu0 %v482
    %582 = vmatprep.subr.mxu0 %v481
    %583 = vmatpush2.msra.mxu0 %v480
    %584 = vmatprep.subr.mxu0 %v479
    %585 = vmatpush2.msra.mxu0 %v478
    %586 = vmatprep.mubr.f32.mxu0 %v413
    %587 = vmatmul.mubr.f32.gmra.mxu0 %v412
    %v588 = vpop.f32.mrf.mxu0
    %v589 = vadd.f32 %v515, %v588
    %v590 = vpop.f32.mrf.mxu0
    %v591 = vadd.f32 %v519, %v590
    %592 = vdwg.mxu0
    %v593 = vmax.f32 %v589, 0.0
    %v594 = vmax.f32 %v591, 0.0
    %v595 = vld [vmem:[#allocation10] sm:$0xf]
    %v596 = vld [vmem:[#allocation10 + $0x4] sm:$0xf]
    %v597 = vld [vmem:[#allocation10 + $0x8] sm:$0xf]
    %v598 = vld [vmem:[#allocation10 + $0xc] sm:$0xf]
    %v599 = vld [vmem:[#allocation10 + $0x10] sm:$0xf]
    %v600 = vld [vmem:[#allocation10 + $0x14] sm:$0xf]
    %v601 = vld [vmem:[#allocation10 + $0x18] sm:$0xf]
    %v602 = vld [vmem:[#allocation10 + $0x1c] sm:$0xf]
    %v603 = vld [vmem:[#allocation10 + $0x20] sm:$0xf]
    %v604 = vld [vmem:[#allocation10 + $0x24] sm:$0xf]
    %v605 = vld [vmem:[#allocation10 + $0x28] sm:$0xf]
    %v606 = vld [vmem:[#allocation10 + $0x2c] sm:$0xf]
    %v607 = vld [vmem:[#allocation10 + $0x30] sm:$0xf]
    %v608 = vld [vmem:[#allocation10 + $0x34] sm:$0xf]
    %v609 = vld [vmem:[#allocation10 + $0x38] sm:$0xf]
    %v610 = vld [vmem:[#allocation10 + $0x3c] sm:$0xf]
    %v611 = vld [vmem:[#allocation10 + $0x40] sm:$0xf]
    %v612 = vld [vmem:[#allocation10 + $0x44] sm:$0xf]
    %v613 = vld [vmem:[#allocation10 + $0x48] sm:$0xf]
    %v614 = vld [vmem:[#allocation10 + $0x4c] sm:$0xf]
    %v615 = vld [vmem:[#allocation10 + $0x50] sm:$0xf]
    %v616 = vld [vmem:[#allocation10 + $0x54] sm:$0xf]
    %v617 = vld [vmem:[#allocation10 + $0x58] sm:$0xf]
    %v618 = vld [vmem:[#allocation10 + $0x5c] sm:$0xf]
    %v619 = vld [vmem:[#allocation10 + $0x60] sm:$0xf]
    %v620 = vld [vmem:[#allocation10 + $0x64] sm:$0xf]
    %v621 = vld [vmem:[#allocation10 + $0x68] sm:$0xf]
    %v622 = vld [vmem:[#allocation10 + $0x6c] sm:$0xf]
    %v623 = vld [vmem:[#allocation10 + $0x70] sm:$0xf]
    %v624 = vld [vmem:[#allocation10 + $0x74] sm:$0xf]
    %v625 = vld [vmem:[#allocation10 + $0x78] sm:$0xf]
    %v626 = vld [vmem:[#allocation10 + $0x7c] sm:$0xf]
    %v627 = vunpack.c.l.bf16 %v595
    %v628 = vunpack.c.l.bf16 %v596
    %v629 = vunpack.c.l.bf16 %v597
    %v630 = vunpack.c.l.bf16 %v598
    %v631 = vunpack.c.l.bf16 %v599
    %v632 = vunpack.c.l.bf16 %v600
    %v633 = vunpack.c.l.bf16 %v601
    %v634 = vunpack.c.l.bf16 %v602
    %v635 = vunpack.c.l.bf16 %v603
    %v636 = vunpack.c.l.bf16 %v604
    %v637 = vunpack.c.l.bf16 %v605
    %v638 = vunpack.c.l.bf16 %v606
    %v639 = vunpack.c.l.bf16 %v607
    %v640 = vunpack.c.l.bf16 %v608
    %v641 = vunpack.c.l.bf16 %v609
    %v642 = vunpack.c.l.bf16 %v610
    %v643 = vunpack.c.l.bf16 %v611
    %v644 = vunpack.c.l.bf16 %v612
    %v645 = vunpack.c.l.bf16 %v613
    %v646 = vunpack.c.l.bf16 %v614
    %v647 = vunpack.c.l.bf16 %v615
    %v648 = vunpack.c.l.bf16 %v616
    %v649 = vunpack.c.l.bf16 %v617
    %v650 = vunpack.c.l.bf16 %v618
    %v651 = vunpack.c.l.bf16 %v619
    %v652 = vunpack.c.l.bf16 %v620
    %v653 = vunpack.c.l.bf16 %v621
    %v654 = vunpack.c.l.bf16 %v622
    %v655 = vunpack.c.l.bf16 %v623
    %v656 = vunpack.c.l.bf16 %v624
    %v657 = vunpack.c.l.bf16 %v625
    %v658 = vunpack.c.l.bf16 %v626
    %v659 = vld [vmem:[%s8] sm:$0x1]
    %v661 = vlaneseq
    %v662 = vshrl.u32 %v661, 7
    %v663 = vsub.s32 0, %v662
    %v664 = vrot.slane %v659, %v663
    %666 = vmatprep.subr.mxu0 0.0
    %667 = vmatpush1.msra.mxu0 %v642
    %668 = vmatprep.subr.mxu0 0.0
    %669 = vmatpush1.msra.mxu0 %v641
    %670 = vmatprep.subr.mxu0 0.0
    %671 = vmatpush1.msra.mxu0 %v640
    %672 = vmatprep.subr.mxu0 0.0
    %673 = vmatpush1.msra.mxu0 %v639
    %674 = vmatprep.subr.mxu0 0.0
    %675 = vmatpush1.msra.mxu0 %v638
    %676 = vmatprep.subr.mxu0 0.0
    %677 = vmatpush1.msra.mxu0 %v637
    %678 = vmatprep.subr.mxu0 0.0
    %679 = vmatpush1.msra.mxu0 %v636
    %680 = vmatprep.subr.mxu0 0.0
    %681 = vmatpush1.msra.mxu0 %v635
    %682 = vmatprep.subr.mxu0 0.0
    %683 = vmatpush1.msra.mxu0 %v634
    %684 = vmatprep.subr.mxu0 0.0
    %685 = vmatpush1.msra.mxu0 %v633
    %686 = vmatprep.subr.mxu0 0.0
    %687 = vmatpush1.msra.mxu0 %v632
    %688 = vmatprep.subr.mxu0 0.0
    %689 = vmatpush1.msra.mxu0 %v631
    %690 = vmatprep.subr.mxu0 0.0
    %691 = vmatpush1.msra.mxu0 %v630
    %692 = vmatprep.subr.mxu0 0.0
    %693 = vmatpush1.msra.mxu0 %v629
    %694 = vmatprep.subr.mxu0 0.0
    %695 = vmatpush1.msra.mxu0 %v628
    %696 = vmatprep.subr.mxu0 0.0
    %697 = vmatpush1.msra.mxu0 %v627
    %698 = vmatprep.subr.mxu0 0.0
    %699 = vmatpush2.msra.mxu0 %v658
    %700 = vmatprep.subr.mxu0 0.0
    %701 = vmatpush2.msra.mxu0 %v657
    %702 = vmatprep.subr.mxu0 0.0
    %703 = vmatpush2.msra.mxu0 %v656
    %704 = vmatprep.subr.mxu0 0.0
    %705 = vmatpush2.msra.mxu0 %v655
    %706 = vmatprep.subr.mxu0 0.0
    %707 = vmatpush2.msra.mxu0 %v654
    %708 = vmatprep.subr.mxu0 0.0
    %709 = vmatpush2.msra.mxu0 %v653
    %710 = vmatprep.subr.mxu0 0.0
    %711 = vmatpush2.msra.mxu0 %v652
    %712 = vmatprep.subr.mxu0 0.0
    %713 = vmatpush2.msra.mxu0 %v651
    %714 = vmatprep.subr.mxu0 0.0
    %715 = vmatpush2.msra.mxu0 %v650
    %716 = vmatprep.subr.mxu0 0.0
    %717 = vmatpush2.msra.mxu0 %v649
    %718 = vmatprep.subr.mxu0 0.0
    %719 = vmatpush2.msra.mxu0 %v648
    %720 = vmatprep.subr.mxu0 0.0
    %721 = vmatpush2.msra.mxu0 %v647
    %722 = vmatprep.subr.mxu0 0.0
    %723 = vmatpush2.msra.mxu0 %v646
    %724 = vmatprep.subr.mxu0 0.0
    %725 = vmatpush2.msra.mxu0 %v645
    %726 = vmatprep.subr.mxu0 0.0
    %727 = vmatpush2.msra.mxu0 %v644
    %728 = vmatprep.subr.mxu0 0.0
    %729 = vmatpush2.msra.mxu0 %v643
    %730 = vmatprep.mubr.f32.mxu0 %v594
    %731 = vmatmul.mubr.f32.gmra.mxu0 %v593
    %v732 = vpop.f32.mrf.mxu0
    %v733 = vadd.f32 %v664, %v732
    %v734 = vpop.f32.mrf.mxu0
    %735 = vdwg.mxu0
    %v736 = vlaneseq
    %v737 = vand.u32 %v736, 127
    %vm738 = vcmp.ge.s32.totalorder %v737, 4
    %vm739 = vcmp.lt.s32.totalorder %v737, 8
    %vm740 = vmand %vm738, %vm739
    %v741 = vmax.f32 %v733, -20.0
    %v742 = vmin.f32 %v741, 2.0
    %v743 = vsel %vm740, %v742, %v733
    %744 = vst [vmem:[#allocation11] sm:$0xff] %v743
    // Predicated region
    $region58: #{tpu_custom_call.1} parent=1 // pred_check
      _
    $region59: #{tpu_custom_call.1} parent=1 // pred_check_branch
      %746 = sbr.rel (0) target = $region61
    $region60: #{tpu_custom_call.1} parent=1 // pred_region
      %s748 = ssub.s32 128, 128
      %749 = vsyncadd [#allocation4], %s748
      %s751 = sshll.u32 [#allocation11], 4
      %s752 = int_to_ptr.vmem [resolvable:$true] %s751
      %754 = dma.vmem_to_hbm [thread:$0]  %s752, 128, %s9, [#allocation4]
    $region61: #{tpu_custom_call.1} parent=1 // pred_fallthru
      _
    // Predicated region
    $region62: #{tpu_custom_call.1} parent=1 // pred_check
      _
    $region63: #{tpu_custom_call.1} parent=1 // pred_check_branch
      %756 = sbr.rel (0) target = $region65
    $region64: #{tpu_custom_call.1} parent=1 // pred_region
      %757 = dma.done [#allocation4], 128
    $region65: #{tpu_custom_call.1} parent=1 // pred_fallthru
      _
    %758 = vsyncpa [#allocation3], 1
    %759 = vsyncpa [#allocation6], 1
    %760 = vsyncpa [#allocation9], 1
    %761 = vsyncpa [#allocation4], 1

</llo_original>
